<compile_context>
chip_gen: v6e
topology: v6e:2x2x1
jax: 0.10.0
libtpu: 0.0.40
codegen_flags: <defaults>
</compile_context>

<pallas_src>
import jax
import jax.numpy as jnp
from jax.experimental import pallas as pl
from jax.experimental.pallas import tpu as pltpu

OUT_PER_SCALE = 100
OUT_TOTAL = 3 * OUT_PER_SCALE          # 300
OUT_PAD = 384                          # 300 rounded up to a multiple of 128


def _round_up(a, b):
    return (a + b - 1) // b * b


def _pick_tiles(N):
    """Row tile TM, K tile TK and padded size N_pad (TM | N_pad, TK | N_pad)."""
    N8 = _round_up(N, 8)
    if N8 <= 512:
        # Whole (padded) L fits comfortably in VMEM: a single full-extent
        # block on both axes (full-dim blocks are exempt from the (8,128) rule).
        return N8, N8, N8
    N_pad = _round_up(N, 128)
    TK = 512 if N_pad % 512 == 0 else (256 if N_pad % 256 == 0 else 128)
    TM = 256 if N_pad % 256 == 0 else 128
    return TM, TK, N_pad


# ---------------------------------------------------------------------------
# Pass 1: T1 = L_tilde @ x, tiled (TM rows) x (TK reduction columns).
# ---------------------------------------------------------------------------
def _t1_kernel(L_ref, x_ref, t1_ref, acc_ref):
    @pl.when(pl.program_id(1) == 0)
    def _():
        acc_ref[...] = jnp.zeros_like(acc_ref)

    acc_ref[...] += jnp.dot(L_ref[...], x_ref[...],
                            preferred_element_type=jnp.float32)

    @pl.when(pl.program_id(1) == pl.num_programs(1) - 1)
    def _():
        t1_ref[...] = acc_ref[...]


# ---------------------------------------------------------------------------
# Pass 2: per (row tile i, K tile k),
#   acc += L[i, k] @ T1[k]                       (accumulated over k)
# and on the last k:
#   T2_tile  = 2 * acc - T0_tile
#   out_tile = T0_tile @ W0cat + T1_tile @ W1cat + T2_tile @ W2cat + bcat
# where W*cat are the (C, 384) zero-packed fused projection weights.
# Single lane-dense (TM, 384) store.
# ---------------------------------------------------------------------------
def _proj_kernel(L_ref, t1k_ref, x_tile_ref, t1_tile_ref,
                 w0_ref, w1_ref, w2_ref, b_ref, out_ref, acc_ref):
    k = pl.program_id(1)

    @pl.when(k == 0)
    def _():
        acc_ref[...] = jnp.zeros_like(acc_ref)

    acc_ref[...] += jnp.dot(L_ref[...], t1k_ref[...],
                            preferred_element_type=jnp.float32)

    @pl.when(k == pl.num_programs(1) - 1)
    def _():
        T0 = x_tile_ref[...]
        T1 = t1_tile_ref[...]
        T2 = 2.0 * acc_ref[...] - T0
        out = jnp.dot(T0, w0_ref[...], preferred_element_type=jnp.float32)
        out = out + jnp.dot(T1, w1_ref[...], preferred_element_type=jnp.float32)
        out = out + jnp.dot(T2, w2_ref[...], preferred_element_type=jnp.float32)
        out_ref[...] = out + b_ref[...]


def scaled_laplacian_dense(edge_index, edge_weight, num_nodes):
    """Dense L_tilde = -D^{-1/2} A D^{-1/2} (ChebConv sym norm, lambda_max=2)."""
    row, col = edge_index[0], edge_index[1]
    deg = jnp.zeros((num_nodes,), jnp.float32).at[row].add(edge_weight)
    dinv = jnp.where(deg > 0, deg ** -0.5, 0.0)
    norm = -dinv[row] * edge_weight * dinv[col]
    # PyG message passing aggregates at the target (col) index.
    L = jnp.zeros((num_nodes, num_nodes), jnp.float32).at[col, row].add(norm)
    # I (from the Laplacian) and the extra -1 self-loops cancel -> zero diag.
    return L


def _fuse_params(params, C):
    """Pack the six projection weights / three biases into lane-dense slabs."""
    W0 = jnp.zeros((C, OUT_PAD), jnp.float32)
    W0 = W0.at[:, 0:100].set(params["w10"])
    W0 = W0.at[:, 100:200].set(params["w20"])
    W0 = W0.at[:, 200:300].set(params["w30"])

    W1 = jnp.zeros((C, OUT_PAD), jnp.float32)
    W1 = W1.at[:, 100:200].set(params["w21"])
    W1 = W1.at[:, 200:300].set(params["w31"])

    W2 = jnp.zeros((C, OUT_PAD), jnp.float32)
    W2 = W2.at[:, 200:300].set(params["w32"])

    B = jnp.zeros((1, OUT_PAD), jnp.float32)
    B = B.at[:, 0:100].set(params["b1"])
    B = B.at[:, 100:200].set(params["b2"])
    B = B.at[:, 200:300].set(params["b3"])
    return W0, W1, W2, B


def multichev_b(x, edge_index, edge_weight, params):
    N, C = x.shape
    L = scaled_laplacian_dense(edge_index, edge_weight, N)

    TM, TK, N_pad = _pick_tiles(N)
    n_row = N_pad // TM
    n_k = N_pad // TK

    # Zero-padded dense operands (padded rows/cols contribute nothing).
    L_pad = jnp.zeros((N_pad, N_pad), jnp.float32).at[:N, :N].set(L)
    x_pad = jnp.zeros((N_pad, C), jnp.float32).at[:N, :].set(x)

    W0, W1, W2, B = _fuse_params(params, C)

    cparams = pltpu.CompilerParams(
        dimension_semantics=("parallel", "arbitrary"))

    # ---- pass 1: T1 = L @ x -------------------------------------------------
    t1 = pl.pallas_call(
        _t1_kernel,
        out_shape=jax.ShapeDtypeStruct((N_pad, C), jnp.float32),
        grid=(n_row, n_k),
        in_specs=[
            pl.BlockSpec((TM, TK), lambda i, k: (i, k)),   # L tile
            pl.BlockSpec((TK, C), lambda i, k: (k, 0)),    # x K-slab
        ],
        out_specs=pl.BlockSpec((TM, C), lambda i, k: (i, 0)),
        scratch_shapes=[pltpu.VMEM((TM, C), jnp.float32)],
        compiler_params=cparams,
    )(L_pad, x_pad)

    # ---- pass 2: T2 accumulation + fused projections + bias -----------------
    out_pad = pl.pallas_call(
        _proj_kernel,
        out_shape=jax.ShapeDtypeStruct((N_pad, OUT_PAD), jnp.float32),
        grid=(n_row, n_k),
        in_specs=[
            pl.BlockSpec((TM, TK), lambda i, k: (i, k)),       # L tile
            pl.BlockSpec((TK, C), lambda i, k: (k, 0)),        # T1 K-slab
            pl.BlockSpec((TM, C), lambda i, k: (i, 0)),        # T0 tile (rows of x)
            pl.BlockSpec((TM, C), lambda i, k: (i, 0)),        # T1 tile
            pl.BlockSpec((C, OUT_PAD), lambda i, k: (0, 0)),   # fused W0cat
            pl.BlockSpec((C, OUT_PAD), lambda i, k: (0, 0)),   # fused W1cat
            pl.BlockSpec((C, OUT_PAD), lambda i, k: (0, 0)),   # fused W2cat
            pl.BlockSpec((1, OUT_PAD), lambda i, k: (0, 0)),   # fused bias
        ],
        out_specs=pl.BlockSpec((TM, OUT_PAD), lambda i, k: (i, 0)),
        scratch_shapes=[pltpu.VMEM((TM, C), jnp.float32)],
        compiler_params=cparams,
    )(L_pad, t1, x_pad, t1, W0, W1, W2, B)

    # Strip row padding and the 84 lane-padding columns -> (N, 300).
    return out_pad[:N, :OUT_TOTAL]


def _reference(x, edge_index, edge_weight, params):
    L = scaled_laplacian_dense(edge_index, edge_weight, x.shape[0])
    T0 = x
    T1 = L @ T0
    T2 = 2.0 * (L @ T1) - T0
    s1 = T0 @ params["w10"] + params["b1"]
    s2 = T0 @ params["w20"] + T1 @ params["w21"] + params["b2"]
    s3 = T0 @ params["w30"] + T1 @ params["w31"] + T2 @ params["w32"] + params["b3"]
    return jnp.concatenate([s1, s2, s3], axis=1)


if __name__ == "__main__":
    N = 16            # number of graph nodes
    C = 8             # in_channels
    key = jax.random.PRNGKey(0)
    k_x, k_w, k_ew = jax.random.split(key, 3)

    # Node features.
    x = jax.random.normal(k_x, (N, C), jnp.float32)

    # Undirected ring graph (no self-loops), symmetric positive weights.
    src = jnp.arange(N, dtype=jnp.int32)
    dst = (src + 1) % N
    w_half = jax.random.uniform(k_ew, (N,), jnp.float32, 0.5, 1.5)
    edge_index = jnp.stack([jnp.concatenate([src, dst]),
                            jnp.concatenate([dst, src])], axis=0)     # (2, 2N)
    edge_weight = jnp.concatenate([w_half, w_half])                   # (2N,)

    # Deterministic parameter init (glorot-like scale), shapes from __init__:
    # three ChebConv(in_channels=C, out=100) with K = 1, 2, 3.
    def init_w(k):
        return jax.random.normal(k, (C, OUT_PER_SCALE), jnp.float32) * \
            (2.0 / (C + OUT_PER_SCALE)) ** 0.5

    kw = jax.random.split(k_w, 6)
    params = {
        "w10": init_w(kw[0]),
        "w20": init_w(kw[1]), "w21": init_w(kw[2]),
        "w30": init_w(kw[3]), "w31": init_w(kw[4]), "w32": init_w(kw[5]),
        "b1": jnp.zeros((1, OUT_PER_SCALE), jnp.float32),
        "b2": jnp.zeros((1, OUT_PER_SCALE), jnp.float32),
        "b3": jnp.zeros((1, OUT_PER_SCALE), jnp.float32),
    }

    out = multichev_b(x, edge_index, edge_weight, params)
    jax.block_until_ready(out)

    ref = _reference(x, edge_index, edge_weight, params)
    assert out.shape == (N, OUT_TOTAL), out.shape
    assert jnp.allclose(out, ref, atol=1e-4, rtol=1e-4), \
        float(jnp.abs(out - ref).max())
    print("KERNEL_OK")
</pallas_src>

<mosaic_0001>
module attributes {stable_mosaic.version = 11 : i64} {
  func.func @_t1_kernel(%arg0: i32, %arg1: i32, %arg2: memref<16x16xf32, #tpu.memory_space<vmem>>, %arg3: memref<16x8xf32, #tpu.memory_space<vmem>>, %arg4: memref<16x8xf32, #tpu.memory_space<vmem>>, %arg5: memref<16x8xf32, #tpu.memory_space<vmem>>) attributes {dimension_semantics = [#tpu.dimension_semantics<parallel>, #tpu.dimension_semantics<arbitrary>], iteration_bounds = array<i64: 1, 1>, scalar_prefetch = 0 : i64, scratch_operands = 1 : i64, tpu.core_type = #tpu.core_type<tc>, window_params = [{transform_indices = @transform_0, window_bounds = array<i64: 16, 16>}, {transform_indices = @transform_1, window_bounds = array<i64: 16, 8>}, {transform_indices = @transform_2, window_bounds = array<i64: 16, 8>}]} {
    %c0_i32 = arith.constant 0 : i32
    %0 = arith.cmpi eq, %arg1, %c0_i32 : i32
    %1 = arith.extui %0 : i1 to i32
    %c0_i32_0 = arith.constant 0 : i32
    %2 = arith.cmpi ne, %1, %c0_i32_0 : i32
    scf.if %2 {
      %cst_10 = arith.constant 0.000000e+00 : f32
      %12 = vector.broadcast %cst_10 : f32 to vector<16x8xf32>
      %c0_11 = arith.constant 0 : index
      %c0_12 = arith.constant 0 : index
      %13 = vector.load %arg5[%c0_11, %c0_12] : memref<16x8xf32, #tpu.memory_space<vmem>>, vector<16x8xf32>
      tpu.vector_store %arg5[%c0_11, %c0_12], %12 {strides = array<i32>} : memref<16x8xf32, #tpu.memory_space<vmem>>, vector<16x8xf32>,
    } else {
    }
    %c0 = arith.constant 0 : index
    %c0_1 = arith.constant 0 : index
    %3 = vector.load %arg5[%c0, %c0_1] : memref<16x8xf32, #tpu.memory_space<vmem>>, vector<16x8xf32>
    %c0_2 = arith.constant 0 : index
    %c0_3 = arith.constant 0 : index
    %4 = vector.load %arg2[%c0_2, %c0_3] : memref<16x16xf32, #tpu.memory_space<vmem>>, vector<16x16xf32>
    %c0_4 = arith.constant 0 : index
    %c0_5 = arith.constant 0 : index
    %5 = vector.load %arg3[%c0_4, %c0_5] : memref<16x8xf32, #tpu.memory_space<vmem>>, vector<16x8xf32>
    %cst = arith.constant dense<0.000000e+00> : vector<16x8xf32>
    %6 = tpu.matmul %4, %5, %cst {dimension_numbers = #tpu.dot_dimension_numbers<[1], [0], [0], [1], [0, 0, 1, 1], [], []>} : vector<16x16xf32>, vector<16x8xf32>, vector<16x8xf32> -> vector<16x8xf32>
    %7 = arith.addf %3, %6 : vector<16x8xf32>
    %c0_6 = arith.constant 0 : index
    %c0_7 = arith.constant 0 : index
    %8 = vector.load %arg5[%c0_6, %c0_7] : memref<16x8xf32, #tpu.memory_space<vmem>>, vector<16x8xf32>
    tpu.vector_store %arg5[%c0_6, %c0_7], %7 {strides = array<i32>} : memref<16x8xf32, #tpu.memory_space<vmem>>, vector<16x8xf32>,
    %c0_i32_8 = arith.constant 0 : i32
    %9 = arith.cmpi eq, %arg1, %c0_i32_8 : i32
    %10 = arith.extui %9 : i1 to i32
    %c0_i32_9 = arith.constant 0 : i32
    %11 = arith.cmpi ne, %10, %c0_i32_9 : i32
    scf.if %11 {
      %c0_10 = arith.constant 0 : index
      %c0_11 = arith.constant 0 : index
      %12 = vector.load %arg5[%c0_10, %c0_11] : memref<16x8xf32, #tpu.memory_space<vmem>>, vector<16x8xf32>
      %c0_12 = arith.constant 0 : index
      %c0_13 = arith.constant 0 : index
      %13 = vector.load %arg4[%c0_12, %c0_13] : memref<16x8xf32, #tpu.memory_space<vmem>>, vector<16x8xf32>
      tpu.vector_store %arg4[%c0_12, %c0_13], %12 {strides = array<i32>} : memref<16x8xf32, #tpu.memory_space<vmem>>, vector<16x8xf32>,
    } else {
    }
    return
  }
  func.func @transform_0(%arg0: i32, %arg1: i32) -> (i32, i32) {
    %c0_i32 = arith.constant 0 : i32
    return %arg0, %arg1 : i32, i32
  }
  func.func @transform_1(%arg0: i32, %arg1: i32) -> (i32, i32) {
    %c0_i32 = arith.constant 0 : i32
    %c0_i32_0 = arith.constant 0 : i32
    return %arg1, %c0_i32 : i32, i32
  }
  func.func @transform_2(%arg0: i32, %arg1: i32) -> (i32, i32) {
    %c0_i32 = arith.constant 0 : i32
    %c0_i32_0 = arith.constant 0 : i32
    return %arg0, %c0_i32 : i32, i32
  }
}

</mosaic_0001>

<llo_original>
// kernel: tpu_custom_call.1
$region0: #{tpu_custom_call.1}
  #allocation0 [shape = 'u32[]', space=smem, size = 0x4, offset = 0x4, fixed_abs, tag = 'smem constant byte address 0x4 - core index']
  #allocation1 [shape = 'u32[144,128]{1,0:T(1,128)}', space=vmem, size = 0x12000, scoped, tag = 'internal scratch']
  #allocation2 [shape = 'f32[16,8]{1,0:T(8,128)}', space=vmem, size = 0x2000, scoped, tag = 'scratch operand']
  %s0 = inlined_call_operand.vmem [shape: f32[16,16], index: 0, kind: input, shape index: {}]
  %s1 = inlined_call_operand.vmem [shape: f32[16,8], index: 1, kind: input, shape index: {}]
  %s2 = inlined_call_operand.vmem [shape: f32[16,8], index: 2, kind: output, shape index: {}]
  %s3 = sld [smem:[#allocation0]]
  $region26: #{tpu_custom_call.1} parent=0
    _
  %s5 = ssub.s32 1, %s3
  %s6 = scalar_select 0, %s5, %s3
  // Predicated region
  $region2: #{tpu_custom_call.1} parent=0 // pred_check
    _
  $region3: #{tpu_custom_call.1} parent=0 // pred_check_branch
    %8 = sbr.rel (0) target = $region5
  $region4: #{tpu_custom_call.1} parent=0 // pred_region
    _
  $region5: #{tpu_custom_call.1} parent=0 // pred_fallthru
    _
  // Predicated region
  $region6: #{tpu_custom_call.1} parent=0 // pred_check
    _
  $region7: #{tpu_custom_call.1} parent=0 // pred_check_branch
    %10 = sbr.rel (0) target = $region9
  $region8: #{tpu_custom_call.1} parent=0 // pred_region
    _
  $region9: #{tpu_custom_call.1} parent=0 // pred_fallthru
    _
  %p11 = scmp.eq.s32.totalorder 0, 0
  // Predicated region
  $region10: #{tpu_custom_call.1} parent=0 // pred_check
    %p12 = pneg %p11
  $region11: #{tpu_custom_call.1} parent=0 // pred_check_branch
    %14 = sbr.rel (%p12) target = $region13
  $region12: #{tpu_custom_call.1} parent=0 // pred_region
    %vm15 = vcmask 64512
    %16 = vst.msk [vmem:[#allocation2] sm:$0xff] %vm15, 0.0
    %17 = vst.msk [vmem:[#allocation2 + $0x8] sm:$0xff] %vm15, 0.0
  $region13: #{tpu_custom_call.1} parent=0 // pred_fallthru
    _
  %v18 = vld [vmem:[#allocation2] sm:$0xff]
  %v19 = vld [vmem:[#allocation2 + $0x8] sm:$0xff]
  %v20 = vld [vmem:[%s0] sm:$0xff]
  %v21 = vld [vmem:[%s0 + $0x8] sm:$0xff]
  %v22 = vld [vmem:[%s1] sm:$0xff]
  %v23 = vld [vmem:[%s1 + $0x8] sm:$0xff]
  %vm24 = vcmask 130048
  %v26 = vsel %vm24, %v20, 0
  %v29 = vsel %vm24, %v21, 0
  %31 = vmatprep.subr.mxu0 0.0
  %32 = vmatpush1.msra.mxu0 0.0
  %33 = vmatprep.subr.mxu0 0.0
  %34 = vmatpush1.msra.mxu0 0.0
  %35 = vmatprep.subr.mxu0 0.0
  %36 = vmatpush1.msra.mxu0 0.0
  %37 = vmatprep.subr.mxu0 0.0
  %38 = vmatpush1.msra.mxu0 0.0
  %39 = vmatprep.subr.mxu0 0.0
  %40 = vmatpush1.msra.mxu0 0.0
  %41 = vmatprep.subr.mxu0 0.0
  %42 = vmatpush1.msra.mxu0 0.0
  %43 = vmatprep.subr.mxu0 0.0
  %44 = vmatpush1.msra.mxu0 0.0
  %45 = vmatprep.subr.mxu0 0.0
  %46 = vmatpush1.msra.mxu0 0.0
  %47 = vmatprep.subr.mxu0 0.0
  %48 = vmatpush1.msra.mxu0 0.0
  %49 = vmatprep.subr.mxu0 0.0
  %50 = vmatpush1.msra.mxu0 0.0
  %51 = vmatprep.subr.mxu0 0.0
  %52 = vmatpush1.msra.mxu0 0.0
  %53 = vmatprep.subr.mxu0 0.0
  %54 = vmatpush1.msra.mxu0 0.0
  %55 = vmatprep.subr.mxu0 0.0
  %56 = vmatpush1.msra.mxu0 0.0
  %57 = vmatprep.subr.mxu0 0.0
  %58 = vmatpush1.msra.mxu0 0.0
  %59 = vmatprep.subr.mxu0 0.0
  %60 = vmatpush1.msra.mxu0 %v23
  %61 = vmatprep.subr.mxu0 0.0
  %62 = vmatpush1.msra.mxu0 %v22
  %63 = vmatprep.subr.mxu0 0.0
  %64 = vmatpush2.msra.mxu0 0.0
  %65 = vmatprep.subr.mxu0 0.0
  %66 = vmatpush2.msra.mxu0 0.0
  %67 = vmatprep.subr.mxu0 0.0
  %68 = vmatpush2.msra.mxu0 0.0
  %69 = vmatprep.subr.mxu0 0.0
  %70 = vmatpush2.msra.mxu0 0.0
  %71 = vmatprep.subr.mxu0 0.0
  %72 = vmatpush2.msra.mxu0 0.0
  %73 = vmatprep.subr.mxu0 0.0
  %74 = vmatpush2.msra.mxu0 0.0
  %75 = vmatprep.subr.mxu0 0.0
  %76 = vmatpush2.msra.mxu0 0.0
  %77 = vmatprep.subr.mxu0 0.0
  %78 = vmatpush2.msra.mxu0 0.0
  %79 = vmatprep.subr.mxu0 0.0
  %80 = vmatpush2.msra.mxu0 0.0
  %81 = vmatprep.subr.mxu0 0.0
  %82 = vmatpush2.msra.mxu0 0.0
  %83 = vmatprep.subr.mxu0 0.0
  %84 = vmatpush2.msra.mxu0 0.0
  %85 = vmatprep.subr.mxu0 0.0
  %86 = vmatpush2.msra.mxu0 0.0
  %87 = vmatprep.subr.mxu0 0.0
  %88 = vmatpush2.msra.mxu0 0.0
  %89 = vmatprep.subr.mxu0 0.0
  %90 = vmatpush2.msra.mxu0 0.0
  %91 = vmatprep.subr.mxu0 0.0
  %92 = vmatpush2.msra.mxu0 0.0
  %93 = vmatprep.subr.mxu0 0.0
  %94 = vmatpush2.msra.mxu0 0.0
  %95 = vmatprep.mubr.f32.mxu0 0.0
  %96 = vmatmul.mubr.f32.gmra.mxu0 %v26
  %v97 = vpop.f32.mrf.mxu0
  %v98 = vadd.f32 0.0, %v97
  %v99 = vpop.f32.mrf.mxu0
  %100 = vmatprep.mubr.f32.mxu0 0.0
  %101 = vmatmul.mubr.f32.gmra.mxu0 %v29
  %v102 = vpop.f32.mrf.mxu0
  %v103 = vadd.f32 0.0, %v102
  %v104 = vpop.f32.mrf.mxu0
  %105 = vdwg.mxu0
  %v106 = vadd.f32 %v18, %v98
  %v107 = vadd.f32 %v19, %v103
  %vm108 = vcmask 64512
  %109 = vst.msk [vmem:[#allocation2] sm:$0xff] %vm108, %v106
  %110 = vst.msk [vmem:[#allocation2 + $0x8] sm:$0xff] %vm108, %v107
  // Predicated region
  $region14: #{tpu_custom_call.1} parent=0 // pred_check
    %p111 = pneg %p11
  $region15: #{tpu_custom_call.1} parent=0 // pred_check_branch
    %113 = sbr.rel (%p111) target = $region17
  $region16: #{tpu_custom_call.1} parent=0 // pred_region
    %v114 = vld [vmem:[#allocation2] sm:$0xff]
    %v115 = vld [vmem:[#allocation2 + $0x8] sm:$0xff]
    %116 = vst.msk [vmem:[%s2] sm:$0xff] %vm108, %v114
    %117 = vst.msk [vmem:[%s2 + $0x8] sm:$0xff] %vm108, %v115
  $region17: #{tpu_custom_call.1} parent=0 // pred_fallthru
    _
  // Predicated region
  $region18: #{tpu_custom_call.1} parent=0 // pred_check
    _
  $region19: #{tpu_custom_call.1} parent=0 // pred_check_branch
    %119 = sbr.rel (0) target = $region21
  $region20: #{tpu_custom_call.1} parent=0 // pred_region
    _
  $region21: #{tpu_custom_call.1} parent=0 // pred_fallthru
    _
  // Predicated region
  $region22: #{tpu_custom_call.1} parent=0 // pred_check
    _
  $region23: #{tpu_custom_call.1} parent=0 // pred_check_branch
    %121 = sbr.rel (0) target = $region25
  $region24: #{tpu_custom_call.1} parent=0 // pred_region
    _
  $region25: #{tpu_custom_call.1} parent=0 // pred_fallthru
    _

</llo_original>
